<compile_context>
chip_gen: v7x
topology: tpu7x:2x2x1
jax: 0.10.0
libtpu: 0.0.40
codegen_flags: <defaults>
</compile_context>

<pallas_src>
import functools

import numpy as np
import jax
import jax.numpy as jnp
from jax.experimental import pallas as pl
from jax.experimental.pallas import tpu as pltpu


def _round_up(x, m):
    return (x + m - 1) // m * m


def _cdiv(a, b):
    return -(-a // b)


def _compiler_params(block_bytes, sem):
    # Double-buffered I/O blocks + generous headroom for in-kernel f32 temporaries.
    need = 2 * int(sum(block_bytes))
    lim = 2 * need + (16 << 20)
    lim = max(24 << 20, min(lim, 48 << 20))   # never request v7x's full 64 MiB
    return pltpu.CompilerParams(dimension_semantics=sem, vmem_limit_bytes=lim)


# --------------------------------------------------------------------------
# Pallas kernels
# --------------------------------------------------------------------------
def _mm_bias_kernel(a_ref, b_ref, c_ref, o_ref, *, relu):
    acc = jnp.dot(a_ref[...], b_ref[...], preferred_element_type=jnp.float32)
    acc = acc + c_ref[...]
    if relu:
        acc = jnp.maximum(acc, 0.0)
    o_ref[...] = acc.astype(o_ref.dtype)


def matmul_bias(a, b, bias, relu, out_dtype=jnp.bfloat16):
    """(M,K)@(K,N) + bias[N] (+ReLU).  bf16 MXU operands, f32 accumulate."""
    M, K = a.shape
    K2, N = b.shape
    assert K == K2
    a = a.astype(jnp.bfloat16)
    b = b.astype(jnp.bfloat16)
    bias = jnp.asarray(bias, jnp.float32).reshape(1, N)
    TN = N if N <= 640 else 256
    per_row = 2 * K + 6 * TN                      # a row (bf16) + out row + f32 acc row
    tm_cap = max(256, ((3 << 20) // per_row) // 128 * 128)
    TM = min(_round_up(M, 8), tm_cap)
    grid = (_cdiv(M, TM), _cdiv(N, TN))
    blocks = (TM * K * 2, K * TN * 2, TN * 4, TM * TN * 2)
    out = pl.pallas_call(
        functools.partial(_mm_bias_kernel, relu=relu),
        out_shape=jax.ShapeDtypeStruct((M, N), out_dtype),
        grid=grid,
        in_specs=[
            pl.BlockSpec((TM, K), lambda i, j: (i, 0)),
            pl.BlockSpec((K, TN), lambda i, j: (0, j)),
            pl.BlockSpec((1, TN), lambda i, j: (0, j)),
        ],
        out_specs=pl.BlockSpec((TM, TN), lambda i, j: (i, j)),
        compiler_params=_compiler_params(blocks, ("parallel", "parallel")),
    )(a, b, bias)
    return out


def _conv_fused_kernel(x_ref, w_ref, b_ref, o_ref, *, KH, KW, Wp8, TOH, relu):
    # x_ref: (Hpad*Wp8, Cin) bf16  -- whole padded image, rows flattened (width Wp8)
    # w_ref: (KH*KW, Cin, Cout) bf16 ; b_ref: (1, Cout) f32 ; o_ref: (TOH*Wp8, Cout)
    r = pl.program_id(1)
    L = TOH * Wp8
    acc = None
    for kh in range(KH):
        base = pl.multiple_of((r * TOH + kh) * Wp8, 8)
        rows = x_ref[pl.ds(base, L + 8), :]              # (L+8, Cin)
        for kw in range(KW):
            seg = rows[kw:kw + L, :]                     # (L, Cin)
            part = jnp.dot(seg, w_ref[kh * KW + kw],
                           preferred_element_type=jnp.float32)
            acc = part if acc is None else acc + part
    acc = acc + b_ref[...]
    if relu:
        acc = jnp.maximum(acc, 0.0)
    o_ref[...] = acc.astype(o_ref.dtype)


def conv2d_fused_s1(x, w_taps, bias, KH, KW, ph, pw, relu):
    """Stride-1 KxK conv, NHWC bf16.  im2col fused into the kernel via row offsets."""
    N, H, W, Cin = x.shape
    Cout = w_taps.shape[-1]
    OH = H + 2 * ph - KH + 1
    OW = W + 2 * pw - KW + 1
    Wp8 = _round_up(W + 2 * pw, 8)
    toh_cap = max(1, (1 << 19) // (Wp8 * Cout))          # keep f32 accumulator <~2 MiB
    R = _cdiv(OH, min(OH, toh_cap))
    TOH = _cdiv(OH, R)
    Hpad = R * TOH + KH
    xp = jnp.pad(x, ((0, 0), (ph, Hpad - H - ph), (pw, Wp8 - W - pw), (0, 0)))
    xf = xp.reshape(N, Hpad * Wp8, Cin)
    L = TOH * Wp8
    blocks = (Hpad * Wp8 * Cin * 2, KH * KW * Cin * Cout * 2, Cout * 4, L * Cout * 2)
    out = pl.pallas_call(
        functools.partial(_conv_fused_kernel, KH=KH, KW=KW, Wp8=Wp8, TOH=TOH,
                          relu=relu),
        out_shape=jax.ShapeDtypeStruct((N, R * L, Cout), jnp.bfloat16),
        grid=(N, R),
        in_specs=[
            pl.BlockSpec((None, Hpad * Wp8, Cin), lambda n, r: (n, 0, 0)),
            pl.BlockSpec((KH * KW, Cin, Cout), lambda n, r: (0, 0, 0)),
            pl.BlockSpec((1, Cout), lambda n, r: (0, 0)),
        ],
        out_specs=pl.BlockSpec((None, L, Cout), lambda n, r: (n, r, 0)),
        compiler_params=_compiler_params(blocks, ("parallel", "parallel")),
    )(xf, w_taps, bias)
    return out.reshape(N, R * TOH, Wp8, Cout)[:, :OH, :OW, :]


def conv2d_im2col(x, w_taps, bias, KH, KW, stride, pad, relu):
    """Strided conv (only a handful of stride-2 layers) via NHWC im2col + matmul."""
    N, H, W, C = x.shape
    ph, pw = pad
    if ph or pw:
        x = jnp.pad(x, ((0, 0), (ph, ph), (pw, pw), (0, 0)))
    Hp, Wp = H + 2 * ph, W + 2 * pw
    OH = (Hp - KH) // stride + 1
    OW = (Wp - KW) // stride + 1
    cols = [x[:, kh:kh + stride * (OH - 1) + 1:stride,
               kw:kw + stride * (OW - 1) + 1:stride, :]
            for kh in range(KH) for kw in range(KW)]
    patches = jnp.concatenate(cols, axis=-1).reshape(N * OH * OW, KH * KW * C)
    y = matmul_bias(patches, w_taps.reshape(KH * KW * C, -1), bias, relu=relu)
    return y.reshape(N, OH, OW, -1)


def _avgpool_kernel(x_ref, o_ref, *, Wp8, L):
    acc = None
    for kh in range(3):
        rows = x_ref[pl.ds(kh * Wp8, L + 8), :].astype(jnp.float32)
        for kw in range(3):
            seg = rows[kw:kw + L, :]
            acc = seg if acc is None else acc + seg
    o_ref[...] = (acc * (1.0 / 9.0)).astype(o_ref.dtype)


def avg_pool_3x3_s1_p1(x):
    """F.avg_pool2d(x, 3, stride=1, padding=1), count_include_pad=True, fused."""
    N, H, W, C = x.shape
    Wp8 = _round_up(W + 2, 8)
    Hpad = H + 3
    xp = jnp.pad(x, ((0, 0), (1, 2), (1, Wp8 - W - 1), (0, 0)))
    xf = xp.reshape(N, Hpad * Wp8, C)
    L = H * Wp8
    blocks = (Hpad * Wp8 * C * 2, L * C * 2)
    out = pl.pallas_call(
        functools.partial(_avgpool_kernel, Wp8=Wp8, L=L),
        out_shape=jax.ShapeDtypeStruct((N, L, C), jnp.bfloat16),
        grid=(N,),
        in_specs=[pl.BlockSpec((None, Hpad * Wp8, C), lambda n: (n, 0, 0))],
        out_specs=pl.BlockSpec((None, L, C), lambda n: (n, 0, 0)),
        compiler_params=_compiler_params(blocks, ("parallel",)),
    )(xf)
    return out.reshape(N, H, Wp8, C)[:, :, :W, :]


def _maxpool_kernel(w_ref, o_ref):
    o_ref[...] = jnp.max(w_ref[...], axis=0)


def max_pool_3x3_s2(x):
    N, H, W, C = x.shape
    OH, OW = (H - 3) // 2 + 1, (W - 3) // 2 + 1
    wins = [x[:, kh:kh + 2 * (OH - 1) + 1:2, kw:kw + 2 * (OW - 1) + 1:2, :]
            for kh in range(3) for kw in range(3)]
    stack = jnp.stack(wins, 0).reshape(9, N * OH * OW, C)
    NS = N * OH * OW
    TS = min(_round_up(NS, 8), max(128, ((2 << 20) // (9 * C * 2)) // 8 * 8))
    blocks = (9 * TS * C * 2, TS * C * 2)
    out = pl.pallas_call(
        _maxpool_kernel,
        out_shape=jax.ShapeDtypeStruct((NS, C), x.dtype),
        grid=(_cdiv(NS, TS),),
        in_specs=[pl.BlockSpec((9, TS, C), lambda i: (0, i, 0))],
        out_specs=pl.BlockSpec((TS, C), lambda i: (i, 0)),
        compiler_params=_compiler_params(blocks, ("parallel",)),
    )(stack)
    return out.reshape(N, OH, OW, C)


def _gap_kernel(x_ref, o_ref, *, inv):
    s = jnp.sum(x_ref[...].astype(jnp.float32), axis=0, keepdims=True)
    o_ref[...] = (s * inv).astype(o_ref.dtype)


def global_avg_pool(x):
    """AdaptiveAvgPool2d((1,1)) in NHWC -> (N, C) float32."""
    N, H, W, C = x.shape
    xf = x.reshape(N, H * W, C)
    blocks = (H * W * C * 2, C * 4)
    out = pl.pallas_call(
        functools.partial(_gap_kernel, inv=1.0 / (H * W)),
        out_shape=jax.ShapeDtypeStruct((N, 1, C), jnp.float32),
        grid=(N,),
        in_specs=[pl.BlockSpec((None, H * W, C), lambda n: (n, 0, 0))],
        out_specs=pl.BlockSpec((None, 1, C), lambda n: (n, 0, 0)),
        compiler_params=_compiler_params(blocks, ("parallel",)),
    )(xf)
    return out.reshape(N, C)


# --------------------------------------------------------------------------
# Bilinear resize (PyTorch bilinear, align_corners=False) as two matmuls
# --------------------------------------------------------------------------
def _bilinear_matrix(in_size, out_size):
    m = np.zeros((out_size, in_size), np.float32)
    scale = in_size / out_size
    for o in range(out_size):
        src = max((o + 0.5) * scale - 0.5, 0.0)
        i0 = min(int(np.floor(src)), in_size - 1)
        i1 = min(i0 + 1, in_size - 1)
        frac = src - i0
        m[o, i0] += 1.0 - frac
        m[o, i1] += frac
    return m


def bilinear_resize_nchw_to_nhwc(x, out_h, out_w):
    N, C, H, W = x.shape
    Cm = jnp.asarray(_bilinear_matrix(W, out_w).T, jnp.bfloat16)   # (W, out_w)
    Rm = jnp.asarray(_bilinear_matrix(H, out_h).T, jnp.bfloat16)   # (H, out_h)
    zw = jnp.zeros((out_w,), jnp.float32)
    zh = jnp.zeros((out_h,), jnp.float32)
    t = matmul_bias(x.reshape(N * C * H, W), Cm, zw, relu=False)            # width
    t = t.reshape(N, C, H, out_w).transpose(0, 1, 3, 2).reshape(N * C * out_w, H)
    t = matmul_bias(t, Rm, zh, relu=False)                                  # height
    return t.reshape(N, C, out_w, out_h).transpose(0, 3, 2, 1)              # NHWC


# --------------------------------------------------------------------------
# InceptionV3 (torchvision architecture, deterministic synthetic weights)
# --------------------------------------------------------------------------
class KeyGen:
    def __init__(self, seed):
        self._key = jax.random.PRNGKey(seed)
        self._i = 0

    def __call__(self):
        self._i += 1
        return jax.random.fold_in(self._key, self._i)


class BasicConv2d:
    """Conv2d(bias=False) + BatchNorm2d(eps=1e-3, eval) + ReLU, BN folded into w."""

    def __init__(self, kg, in_c, out_c, k, stride=1, pad=(0, 0)):
        kh, kw = (k, k) if isinstance(k, int) else k
        fan_in = in_c * kh * kw
        w = jax.random.normal(kg(), (out_c, in_c, kh, kw), jnp.float32)
        w = w * float(np.sqrt(2.0 / fan_in))
        # Eval BN with gamma=1, beta=0, mean=0, var=1, eps=1e-3 -> pure scale, folded.
        w = w * float(1.0 / np.sqrt(1.0 + 1e-3))
        # tap-major layout (KH*KW, Cin, Cout), bf16 MXU operand
        self.w_taps = jnp.asarray(
            jnp.transpose(w, (2, 3, 1, 0)).reshape(kh * kw, in_c, out_c),
            jnp.bfloat16)
        self.bias = jnp.zeros((1, out_c), jnp.float32)
        self.k = (kh, kw)
        self.stride = stride
        self.pad = pad

    def __call__(self, x):          # x: NHWC bf16
        kh, kw = self.k
        if self.stride == 1 and kh == 1 and kw == 1:
            n, h, w_, c = x.shape
            y = matmul_bias(x.reshape(n * h * w_, c), self.w_taps[0], self.bias,
                            relu=True)
            return y.reshape(n, h, w_, -1)
        if self.stride == 1:
            return conv2d_fused_s1(x, self.w_taps, self.bias, kh, kw,
                                   self.pad[0], self.pad[1], relu=True)
        return conv2d_im2col(x, self.w_taps, self.bias, kh, kw, self.stride,
                             self.pad, relu=True)


class InceptionA:
    def __init__(self, kg, in_c, pool_f):
        self.b1 = BasicConv2d(kg, in_c, 64, 1)
        self.b5_1 = BasicConv2d(kg, in_c, 48, 1)
        self.b5_2 = BasicConv2d(kg, 48, 64, 5, pad=(2, 2))
        self.b3_1 = BasicConv2d(kg, in_c, 64, 1)
        self.b3_2 = BasicConv2d(kg, 64, 96, 3, pad=(1, 1))
        self.b3_3 = BasicConv2d(kg, 96, 96, 3, pad=(1, 1))
        self.bp = BasicConv2d(kg, in_c, pool_f, 1)

    def __call__(self, x):
        b1 = self.b1(x)
        b5 = self.b5_2(self.b5_1(x))
        b3 = self.b3_3(self.b3_2(self.b3_1(x)))
        bp = self.bp(avg_pool_3x3_s1_p1(x))
        return jnp.concatenate([b1, b5, b3, bp], axis=-1)


class InceptionB:
    def __init__(self, kg, in_c):
        self.b3 = BasicConv2d(kg, in_c, 384, 3, stride=2)
        self.bd_1 = BasicConv2d(kg, in_c, 64, 1)
        self.bd_2 = BasicConv2d(kg, 64, 96, 3, pad=(1, 1))
        self.bd_3 = BasicConv2d(kg, 96, 96, 3, stride=2)

    def __call__(self, x):
        b3 = self.b3(x)
        bd = self.bd_3(self.bd_2(self.bd_1(x)))
        bp = max_pool_3x3_s2(x)
        return jnp.concatenate([b3, bd, bp], axis=-1)


class InceptionC:
    def __init__(self, kg, in_c, c7):
        self.b1 = BasicConv2d(kg, in_c, 192, 1)
        self.b7_1 = BasicConv2d(kg, in_c, c7, 1)
        self.b7_2 = BasicConv2d(kg, c7, c7, (1, 7), pad=(0, 3))
        self.b7_3 = BasicConv2d(kg, c7, 192, (7, 1), pad=(3, 0))
        self.bd_1 = BasicConv2d(kg, in_c, c7, 1)
        self.bd_2 = BasicConv2d(kg, c7, c7, (7, 1), pad=(3, 0))
        self.bd_3 = BasicConv2d(kg, c7, c7, (1, 7), pad=(0, 3))
        self.bd_4 = BasicConv2d(kg, c7, c7, (7, 1), pad=(3, 0))
        self.bd_5 = BasicConv2d(kg, c7, 192, (1, 7), pad=(0, 3))
        self.bp = BasicConv2d(kg, in_c, 192, 1)

    def __call__(self, x):
        b1 = self.b1(x)
        b7 = self.b7_3(self.b7_2(self.b7_1(x)))
        bd = self.bd_5(self.bd_4(self.bd_3(self.bd_2(self.bd_1(x)))))
        bp = self.bp(avg_pool_3x3_s1_p1(x))
        return jnp.concatenate([b1, b7, bd, bp], axis=-1)


class InceptionD:
    def __init__(self, kg, in_c):
        self.b3_1 = BasicConv2d(kg, in_c, 192, 1)
        self.b3_2 = BasicConv2d(kg, 192, 320, 3, stride=2)
        self.b7_1 = BasicConv2d(kg, in_c, 192, 1)
        self.b7_2 = BasicConv2d(kg, 192, 192, (1, 7), pad=(0, 3))
        self.b7_3 = BasicConv2d(kg, 192, 192, (7, 1), pad=(3, 0))
        self.b7_4 = BasicConv2d(kg, 192, 192, 3, stride=2)

    def __call__(self, x):
        b3 = self.b3_2(self.b3_1(x))
        b7 = self.b7_4(self.b7_3(self.b7_2(self.b7_1(x))))
        bp = max_pool_3x3_s2(x)
        return jnp.concatenate([b3, b7, bp], axis=-1)


class InceptionE:
    def __init__(self, kg, in_c):
        self.b1 = BasicConv2d(kg, in_c, 320, 1)
        self.b3_1 = BasicConv2d(kg, in_c, 384, 1)
        self.b3_2a = BasicConv2d(kg, 384, 384, (1, 3), pad=(0, 1))
        self.b3_2b = BasicConv2d(kg, 384, 384, (3, 1), pad=(1, 0))
        self.bd_1 = BasicConv2d(kg, in_c, 448, 1)
        self.bd_2 = BasicConv2d(kg, 448, 384, 3, pad=(1, 1))
        self.bd_3a = BasicConv2d(kg, 384, 384, (1, 3), pad=(0, 1))
        self.bd_3b = BasicConv2d(kg, 384, 384, (3, 1), pad=(1, 0))
        self.bp = BasicConv2d(kg, in_c, 192, 1)

    def __call__(self, x):
        b1 = self.b1(x)
        b3 = self.b3_1(x)
        b3 = jnp.concatenate([self.b3_2a(b3), self.b3_2b(b3)], axis=-1)
        bd = self.bd_2(self.bd_1(x))
        bd = jnp.concatenate([self.bd_3a(bd), self.bd_3b(bd)], axis=-1)
        bp = self.bp(avg_pool_3x3_s1_p1(x))
        return jnp.concatenate([b1, b3, bd, bp], axis=-1)


class InceptionV3Pallas:
    """forward: bilinear resize to 299x299 -> InceptionV3 features -> flatten."""

    def __init__(self, seed=0):
        kg = KeyGen(seed)
        self.c1a = BasicConv2d(kg, 3, 32, 3, stride=2)
        self.c2a = BasicConv2d(kg, 32, 32, 3)
        self.c2b = BasicConv2d(kg, 32, 64, 3, pad=(1, 1))
        self.c3b = BasicConv2d(kg, 64, 80, 1)
        self.c4a = BasicConv2d(kg, 80, 192, 3)
        self.m5b = InceptionA(kg, 192, 32)
        self.m5c = InceptionA(kg, 256, 64)
        self.m5d = InceptionA(kg, 288, 64)
        self.m6a = InceptionB(kg, 288)
        self.m6b = InceptionC(kg, 768, 128)
        self.m6c = InceptionC(kg, 768, 160)
        self.m6d = InceptionC(kg, 768, 160)
        self.m6e = InceptionC(kg, 768, 192)
        # TODO(synk): the AuxLogits child that nn.Sequential(children()[:-1]) would
        # chain in sequence is skipped (it flattens to [N,1000] and is not a valid
        # feature path); canonical Inception3 eval feature forward is used instead.
        # Dropout is identity in eval mode.
        self.m7a = InceptionD(kg, 768)
        self.m7b = InceptionE(kg, 1280)
        self.m7c = InceptionE(kg, 2048)

    def __call__(self, x):                       # x: NCHW float32
        x = bilinear_resize_nchw_to_nhwc(x, 299, 299)   # [N, 299, 299, 3] bf16
        x = self.c1a(x)                          # [N, 149, 149, 32]
        x = self.c2a(x)                          # [N, 147, 147, 32]
        x = self.c2b(x)                          # [N, 147, 147, 64]
        x = max_pool_3x3_s2(x)                   # [N, 73, 73, 64]
        x = self.c3b(x)                          # [N, 73, 73, 80]
        x = self.c4a(x)                          # [N, 71, 71, 192]
        x = max_pool_3x3_s2(x)                   # [N, 35, 35, 192]
        x = self.m5b(x)                          # [N, 35, 35, 256]
        x = self.m5c(x)                          # [N, 35, 35, 288]
        x = self.m5d(x)                          # [N, 35, 35, 288]
        x = self.m6a(x)                          # [N, 17, 17, 768]
        x = self.m6b(x)
        x = self.m6c(x)
        x = self.m6d(x)
        x = self.m6e(x)                          # [N, 17, 17, 768]
        x = self.m7a(x)                          # [N, 8, 8, 1280]
        x = self.m7b(x)                          # [N, 8, 8, 2048]
        x = self.m7c(x)                          # [N, 8, 8, 2048]
        return global_avg_pool(x)                # [N, 2048] float32


if __name__ == "__main__":
    key = jax.random.PRNGKey(0)
    x = jax.random.normal(key, (2, 3, 16, 16), jnp.float32)
    model = InceptionV3Pallas(seed=0)
    y = model(x)
    y = jax.block_until_ready(y)
    assert y.shape == (2, 2048), y.shape
    assert bool(jnp.all(jnp.isfinite(y)))
    print("KERNEL_OK")
</pallas_src>

<mosaic_0001>
module attributes {stable_mosaic.version = 11 : i64} {
  func.func @_mm_bias_kernel(%arg0: i32, %arg1: i32, %arg2: memref<96x16xbf16, #tpu.memory_space<vmem>>, %arg3: memref<16x299xbf16, #tpu.memory_space<vmem>>, %arg4: memref<1x299xf32, #tpu.memory_space<vmem>>, %arg5: memref<96x299xbf16, #tpu.memory_space<vmem>>) attributes {dimension_semantics = [#tpu.dimension_semantics<parallel>, #tpu.dimension_semantics<parallel>], iteration_bounds = array<i64: 1, 1>, scalar_prefetch = 0 : i64, scratch_operands = 0 : i64, tpu.core_type = #tpu.core_type<tc>, window_params = [{transform_indices = @transform_0, window_bounds = array<i64: 96, 16>}, {transform_indices = @transform_1, window_bounds = array<i64: 16, 299>}, {transform_indices = @transform_2, window_bounds = array<i64: 1, 299>}, {transform_indices = @transform_3, window_bounds = array<i64: 96, 299>}]} {
    %c0 = arith.constant 0 : index
    %c0_0 = arith.constant 0 : index
    %0 = vector.load %arg2[%c0, %c0_0] : memref<96x16xbf16, #tpu.memory_space<vmem>>, vector<96x16xbf16>
    %c0_1 = arith.constant 0 : index
    %c0_2 = arith.constant 0 : index
    %1 = vector.load %arg3[%c0_1, %c0_2] : memref<16x299xbf16, #tpu.memory_space<vmem>>, vector<16x299xbf16>
    %cst = arith.constant dense<0.000000e+00> : vector<96x299xf32>
    %2 = tpu.matmul %0, %1, %cst {dimension_numbers = #tpu.dot_dimension_numbers<[1], [0], [0], [1], [0, 0, 1, 1], [], []>} : vector<96x16xbf16>, vector<16x299xbf16>, vector<96x299xf32> -> vector<96x299xf32>
    %c0_3 = arith.constant 0 : index
    %c0_4 = arith.constant 0 : index
    %3 = vector.load %arg4[%c0_3, %c0_4] : memref<1x299xf32, #tpu.memory_space<vmem>>, vector<1x299xf32>
    %4 = vector.broadcast %3 : vector<1x299xf32> to vector<96x299xf32>
    %5 = arith.addf %2, %4 : vector<96x299xf32>
    %6 = arith.truncf %5 : vector<96x299xf32> to vector<96x299xbf16>
    %c0_5 = arith.constant 0 : index
    %c0_6 = arith.constant 0 : index
    %7 = vector.load %arg5[%c0_5, %c0_6] : memref<96x299xbf16, #tpu.memory_space<vmem>>, vector<96x299xbf16>
    tpu.vector_store %arg5[%c0_5, %c0_6], %6 {strides = array<i32>} : memref<96x299xbf16, #tpu.memory_space<vmem>>, vector<96x299xbf16>,
    return
  }
  func.func @transform_0(%arg0: i32, %arg1: i32) -> (i32, i32) {
    %c0_i32 = arith.constant 0 : i32
    %c0_i32_0 = arith.constant 0 : i32
    return %arg0, %c0_i32 : i32, i32
  }
  func.func @transform_1(%arg0: i32, %arg1: i32) -> (i32, i32) {
    %c0_i32 = arith.constant 0 : i32
    %c0_i32_0 = arith.constant 0 : i32
    return %c0_i32, %arg1 : i32, i32
  }
  func.func @transform_2(%arg0: i32, %arg1: i32) -> (i32, i32) {
    %c0_i32 = arith.constant 0 : i32
    %c0_i32_0 = arith.constant 0 : i32
    return %c0_i32, %arg1 : i32, i32
  }
  func.func @transform_3(%arg0: i32, %arg1: i32) -> (i32, i32) {
    %c0_i32 = arith.constant 0 : i32
    return %arg0, %arg1 : i32, i32
  }
}

</mosaic_0001>

<llo_original>
// kernel: tpu_custom_call.1
$region0: #{tpu_custom_call.1}
  #allocation0 [shape = 'u32[]', space=smem, size = 0x4, offset = 0x4, fixed_abs, tag = 'smem constant byte address 0x4 - core index']
  #allocation1 [shape = 'u32[144,128]{1,0:T(1,128)}', space=vmem, size = 0x12000, scoped, tag = 'internal scratch']
  %s0 = inlined_call_operand.vmem [shape: bf16[96,16], index: 0, kind: input, shape index: {}]
  %s1 = inlined_call_operand.vmem [shape: bf16[16,299], index: 1, kind: input, shape index: {}]
  %s2 = inlined_call_operand.vmem [shape: f32[1,299], index: 2, kind: input, shape index: {}]
  %s3 = inlined_call_operand.hbm [shape: bf16[96,299], index: 3, kind: output, shape index: {}]
  %s4 = sld [smem:[#allocation0]]
  $region22: #{tpu_custom_call.1} parent=0
    _
  %s6 = ssub.s32 1, %s4
  %s7 = scalar_select 0, %s6, %s4
  $region1: #{tpu_custom_call.1} parent=0
    #allocation2 [shape = 'u8[73728]{0}', space=vmem, size = 0x12000, scoped, tag = 'output window, operand 0, single buffered']
    #allocation3 [shape = 's32[1]{0}', space=sflag, size = 0x4, scoped, tag = 'scoped memory for tpu_custom_call.1']
    %8 = vsyncpa [#allocation3], 0
    // Predicated region
    $region2: #{tpu_custom_call.1} parent=1 // pred_check
      _
    $region3: #{tpu_custom_call.1} parent=1 // pred_check_branch
      %10 = sbr.rel (0) target = $region5
    $region4: #{tpu_custom_call.1} parent=1 // pred_region
      _
    $region5: #{tpu_custom_call.1} parent=1 // pred_fallthru
      _
    // Predicated region
    $region6: #{tpu_custom_call.1} parent=1 // pred_check
      _
    $region7: #{tpu_custom_call.1} parent=1 // pred_check_branch
      %12 = sbr.rel (0) target = $region9
    $region8: #{tpu_custom_call.1} parent=1 // pred_region
      _
    $region9: #{tpu_custom_call.1} parent=1 // pred_fallthru
      _
    // Predicated region
    $region10: #{tpu_custom_call.1} parent=1 // pred_check
      _
    $region11: #{tpu_custom_call.1} parent=1 // pred_check_branch
      %14 = sbr.rel (0) target = $region13
    $region12: #{tpu_custom_call.1} parent=1 // pred_region
      _
    $region13: #{tpu_custom_call.1} parent=1 // pred_fallthru
      _
    %v16 = vld [vmem:[%s0] sm:$0xf]
    %v17 = vld [vmem:[%s0 + $0x4] sm:$0xf]
    %v18 = vld [vmem:[%s0 + $0x8] sm:$0xf]
    %v19 = vld [vmem:[%s0 + $0xc] sm:$0xf]
    %v20 = vld [vmem:[%s0 + $0x10] sm:$0xf]
    %v21 = vld [vmem:[%s0 + $0x14] sm:$0xf]
    %v22 = vld [vmem:[%s0 + $0x18] sm:$0xf]
    %v23 = vld [vmem:[%s0 + $0x1c] sm:$0xf]
    %v24 = vld [vmem:[%s0 + $0x20] sm:$0xf]
    %v25 = vld [vmem:[%s0 + $0x24] sm:$0xf]
    %v26 = vld [vmem:[%s0 + $0x28] sm:$0xf]
    %v27 = vld [vmem:[%s0 + $0x2c] sm:$0xf]
    %v28 = vld [vmem:[%s1] sm:$0xff]
    %v29 = vld [vmem:[%s1 + $0x8] sm:$0xf]
    %v30 = vld [vmem:[%s1 + $0xc] sm:$0xff]
    %v31 = vld [vmem:[%s1 + $0x14] sm:$0xf]
    %v32 = vld [vmem:[%s2] sm:$0x7]
    %v34 = vlaneseq
    %v35 = vshrl.u32 %v34, 7
    %v36 = vsub.s32 0, %v35
    %v37 = vrot.slane %v32, %v36
    %v38 = vlaneseq
    %v39 = vshrl.u32 %v38, 7
    %v40 = vsub.s32 1, %v39
    %v41 = vrot.slane %v32, %v40
    %v42 = vlaneseq
    %v43 = vshrl.u32 %v42, 7
    %v44 = vsub.s32 2, %v43
    %v45 = vrot.slane %v32, %v44
    %v61 = vunpack.c.l.b16 %v16
    %v62 = vunpack.c.l.b16 %v17
    %v63 = vunpack.c.l.b16 %v18
    %v64 = vunpack.c.l.b16 %v19
    %v65 = vunpack.c.l.b16 %v20
    %v66 = vunpack.c.l.b16 %v21
    %v67 = vunpack.c.l.b16 %v22
    %v68 = vunpack.c.l.b16 %v23
    %v69 = vunpack.c.l.b16 %v24
    %v70 = vunpack.c.l.b16 %v25
    %v71 = vunpack.c.l.b16 %v26
    %v72 = vunpack.c.l.b16 %v27
    %v73 = vpack.c.b16 %v62, %v61
    %v74 = vpack.c.b16 %v64, %v63
    %v75 = vpack.c.b16 %v66, %v65
    %v76 = vpack.c.b16 %v68, %v67
    %v77 = vpack.c.b16 %v70, %v69
    %v78 = vpack.c.b16 %v72, %v71
    %v83 = vunpack.c.l.b16 %v28
    %v84 = vunpack.c.h.b16 %v28
    %v85 = vunpack.c.l.b16 %v29
    %v86 = vunpack.c.l.b16 %v30
    %v87 = vunpack.c.h.b16 %v30
    %v88 = vunpack.c.l.b16 %v31
    %v89 = vpack.c.b16 %v86, %v83
    %v90 = vpack.c.b16 %v87, %v84
    %v91 = vpack.c.b16 %v88, %v85
    %vm95 = vcmask 130048
    %v97 = vsel %vm95, %v73, 0
    %v100 = vsel %vm95, %v74, 0
    %v103 = vsel %vm95, %v75, 0
    %v106 = vsel %vm95, %v76, 0
    %v109 = vsel %vm95, %v77, 0
    %v112 = vsel %vm95, %v78, 0
    %114 = vmatprep.subr.bf16.mxu0 %v90
    %115 = vmatpush1.bf16.msra.mxu0 %v89
    %116 = vmatprep.subr.bf16.mxu0 0
    %117 = vmatpush1.bf16.msra.mxu0 0
    %118 = vmatprep.subr.bf16.mxu0 0
    %119 = vmatpush1.bf16.msra.mxu0 0
    %120 = vmatprep.subr.bf16.mxu0 0
    %121 = vmatpush1.bf16.msra.mxu0 0
    %122 = vmatprep.subr.bf16.mxu0 0
    %123 = vmatpush1.bf16.msra.mxu0 0
    %124 = vmatprep.subr.bf16.mxu0 0
    %125 = vmatpush1.bf16.msra.mxu0 0
    %126 = vmatprep.subr.bf16.mxu0 0
    %127 = vmatpush1.bf16.msra.mxu0 0
    %128 = vmatprep.subr.bf16.mxu0 0
    %129 = vmatpush1.bf16.msra.mxu0 0
    %130 = vmatprep.subr.bf16.mxu0 0
    %131 = vmatpush1.bf16.msra.mxu0 0
    %132 = vmatprep.subr.bf16.mxu0 0
    %133 = vmatpush1.bf16.msra.mxu0 0
    %134 = vmatprep.subr.bf16.mxu0 0
    %135 = vmatpush1.bf16.msra.mxu0 0
    %136 = vmatprep.subr.bf16.mxu0 0
    %137 = vmatpush1.bf16.msra.mxu0 0
    %138 = vmatprep.subr.bf16.mxu0 0
    %139 = vmatpush1.bf16.msra.mxu0 0
    %140 = vmatprep.subr.bf16.mxu0 0
    %141 = vmatpush1.bf16.msra.mxu0 0
    %142 = vmatprep.subr.bf16.mxu0 0
    %143 = vmatpush1.bf16.msra.mxu0 0
    %144 = vmatprep.subr.bf16.mxu0 0
    %145 = vmatpush1.bf16.msra.mxu0 0
    %146 = vmatprep.mubr.bf16.mxu0 0
    %147 = vmatmul.mubr.bf16.gmra.mrb[0].mxu0 %v97
    %v148 = vpop.f32.mrb[0].mxu0
    %v149 = vadd.f32 %v37, %v148
    %v150 = vpop.f32.mrb[0].mxu0
    %v151 = vadd.f32 %v41, %v150
    %v152 = vpop.f32.mrb[0].mxu0
    %v153 = vadd.f32 %v37, %v152
    %v154 = vpop.f32.mrb[0].mxu0
    %v155 = vadd.f32 %v41, %v154
    %156 = vmatprep.mubr.bf16.mxu0 0
    %157 = vmatmul.mubr.bf16.gmra.mrb[0].mxu0 %v100
    %v158 = vpop.f32.mrb[0].mxu0
    %v159 = vadd.f32 %v37, %v158
    %v160 = vpop.f32.mrb[0].mxu0
    %v161 = vadd.f32 %v41, %v160
    %v162 = vpop.f32.mrb[0].mxu0
    %v163 = vadd.f32 %v37, %v162
    %v164 = vpop.f32.mrb[0].mxu0
    %v165 = vadd.f32 %v41, %v164
    %166 = vmatprep.mubr.bf16.mxu0 0
    %167 = vmatmul.mubr.bf16.gmra.mrb[0].mxu0 %v103
    %v168 = vpop.f32.mrb[0].mxu0
    %v169 = vadd.f32 %v37, %v168
    %v170 = vpop.f32.mrb[0].mxu0
    %v171 = vadd.f32 %v41, %v170
    %v172 = vpop.f32.mrb[0].mxu0
    %v173 = vadd.f32 %v37, %v172
    %v174 = vpop.f32.mrb[0].mxu0
    %v175 = vadd.f32 %v41, %v174
    %176 = vmatprep.mubr.bf16.mxu0 0
    %177 = vmatmul.mubr.bf16.gmra.mrb[0].mxu0 %v106
    %v178 = vpop.f32.mrb[0].mxu0
    %v179 = vadd.f32 %v37, %v178
    %v180 = vpop.f32.mrb[0].mxu0
    %v181 = vadd.f32 %v41, %v180
    %v182 = vpop.f32.mrb[0].mxu0
    %v183 = vadd.f32 %v37, %v182
    %v184 = vpop.f32.mrb[0].mxu0
    %v185 = vadd.f32 %v41, %v184
    %186 = vmatprep.mubr.bf16.mxu0 0
    %187 = vmatmul.mubr.bf16.gmra.mrb[0].mxu0 %v109
    %v188 = vpop.f32.mrb[0].mxu0
    %v189 = vadd.f32 %v37, %v188
    %v190 = vpop.f32.mrb[0].mxu0
    %v191 = vadd.f32 %v41, %v190
    %v192 = vpop.f32.mrb[0].mxu0
    %v193 = vadd.f32 %v37, %v192
    %v194 = vpop.f32.mrb[0].mxu0
    %v195 = vadd.f32 %v41, %v194
    %196 = vmatprep.mubr.bf16.mxu0 0
    %197 = vmatmul.mubr.bf16.gmra.mrb[0].mxu0 %v112
    %v198 = vpop.f32.mrb[0].mxu0
    %v199 = vadd.f32 %v37, %v198
    %v200 = vpop.f32.mrb[0].mxu0
    %v201 = vadd.f32 %v41, %v200
    %v202 = vpop.f32.mrb[0].mxu0
    %v203 = vadd.f32 %v37, %v202
    %v204 = vpop.f32.mrb[0].mxu0
    %v205 = vadd.f32 %v41, %v204
    %206 = vdwg.mxu0
    %207 = vmatprep.subr.bf16.mxu0 0
    %208 = vmatpush1.bf16.msra.mxu0 %v91
    %209 = vmatprep.subr.bf16.mxu0 0
    %210 = vmatpush1.bf16.msra.mxu0 0
    %211 = vmatprep.subr.bf16.mxu0 0
    %212 = vmatpush1.bf16.msra.mxu0 0
    %213 = vmatprep.subr.bf16.mxu0 0
    %214 = vmatpush1.bf16.msra.mxu0 0
    %215 = vmatprep.subr.bf16.mxu0 0
    %216 = vmatpush1.bf16.msra.mxu0 0
    %217 = vmatprep.subr.bf16.mxu0 0
    %218 = vmatpush1.bf16.msra.mxu0 0
    %219 = vmatprep.subr.bf16.mxu0 0
    %220 = vmatpush1.bf16.msra.mxu0 0
    %221 = vmatprep.subr.bf16.mxu0 0
    %222 = vmatpush1.bf16.msra.mxu0 0
    %223 = vmatprep.subr.bf16.mxu0 0
    %224 = vmatpush1.bf16.msra.mxu0 0
    %225 = vmatprep.subr.bf16.mxu0 0
    %226 = vmatpush1.bf16.msra.mxu0 0
    %227 = vmatprep.subr.bf16.mxu0 0
    %228 = vmatpush1.bf16.msra.mxu0 0
    %229 = vmatprep.subr.bf16.mxu0 0
    %230 = vmatpush1.bf16.msra.mxu0 0
    %231 = vmatprep.subr.bf16.mxu0 0
    %232 = vmatpush1.bf16.msra.mxu0 0
    %233 = vmatprep.subr.bf16.mxu0 0
    %234 = vmatpush1.bf16.msra.mxu0 0
    %235 = vmatprep.subr.bf16.mxu0 0
    %236 = vmatpush1.bf16.msra.mxu0 0
    %237 = vmatprep.subr.bf16.mxu0 0
    %238 = vmatpush1.bf16.msra.mxu0 0
    %239 = vmatprep.mubr.bf16.mxu0 0
    %240 = vmatmul.mubr.bf16.gmra.mrb[0].mxu0 %v97
    %v241 = vpop.f32.mrb[0].mxu0
    %v242 = vadd.f32 %v45, %v241
    %v243 = vpop.f32.mrb[0].mxu0
    %v244 = vpop.f32.mrb[0].mxu0
    %v245 = vadd.f32 %v45, %v244
    %v246 = vpop.f32.mrb[0].mxu0
    %247 = vmatprep.mubr.bf16.mxu0 0
    %248 = vmatmul.mubr.bf16.gmra.mrb[0].mxu0 %v100
    %v249 = vpop.f32.mrb[0].mxu0
    %v250 = vadd.f32 %v45, %v249
    %v251 = vpop.f32.mrb[0].mxu0
    %v252 = vpop.f32.mrb[0].mxu0
    %v253 = vadd.f32 %v45, %v252
    %v254 = vpop.f32.mrb[0].mxu0
    %255 = vmatprep.mubr.bf16.mxu0 0
    %256 = vmatmul.mubr.bf16.gmra.mrb[0].mxu0 %v103
    %v257 = vpop.f32.mrb[0].mxu0
    %v258 = vadd.f32 %v45, %v257
    %v259 = vpop.f32.mrb[0].mxu0
    %v260 = vpop.f32.mrb[0].mxu0
    %v261 = vadd.f32 %v45, %v260
    %v262 = vpop.f32.mrb[0].mxu0
    %263 = vmatprep.mubr.bf16.mxu0 0
    %264 = vmatmul.mubr.bf16.gmra.mrb[0].mxu0 %v106
    %v265 = vpop.f32.mrb[0].mxu0
    %v266 = vadd.f32 %v45, %v265
    %v267 = vpop.f32.mrb[0].mxu0
    %v268 = vpop.f32.mrb[0].mxu0
    %v269 = vadd.f32 %v45, %v268
    %v270 = vpop.f32.mrb[0].mxu0
    %271 = vmatprep.mubr.bf16.mxu0 0
    %272 = vmatmul.mubr.bf16.gmra.mrb[0].mxu0 %v109
    %v273 = vpop.f32.mrb[0].mxu0
    %v274 = vadd.f32 %v45, %v273
    %v275 = vpop.f32.mrb[0].mxu0
    %v276 = vpop.f32.mrb[0].mxu0
    %v277 = vadd.f32 %v45, %v276
    %v278 = vpop.f32.mrb[0].mxu0
    %279 = vmatprep.mubr.bf16.mxu0 0
    %280 = vmatmul.mubr.bf16.gmra.mrb[0].mxu0 %v112
    %v281 = vpop.f32.mrb[0].mxu0
    %v282 = vadd.f32 %v45, %v281
    %v283 = vpop.f32.mrb[0].mxu0
    %v284 = vpop.f32.mrb[0].mxu0
    %v285 = vadd.f32 %v45, %v284
    %v286 = vpop.f32.mrb[0].mxu0
    %287 = vdwg.mxu0
    %v288 = vpack.c.bf16 %v153, %v149
    %v289 = vpack.c.bf16 %v155, %v151
    %v290 = vpack.c.bf16 %v245, %v242
    %v291 = vpack.c.bf16 %v163, %v159
    %v292 = vpack.c.bf16 %v165, %v161
    %v293 = vpack.c.bf16 %v253, %v250
    %v294 = vpack.c.bf16 %v173, %v169
    %v295 = vpack.c.bf16 %v175, %v171
    %v296 = vpack.c.bf16 %v261, %v258
    %v297 = vpack.c.bf16 %v183, %v179
    %v298 = vpack.c.bf16 %v185, %v181
    %v299 = vpack.c.bf16 %v269, %v266
    %v300 = vpack.c.bf16 %v193, %v189
    %v301 = vpack.c.bf16 %v195, %v191
    %v302 = vpack.c.bf16 %v277, %v274
    %v303 = vpack.c.bf16 %v203, %v199
    %v304 = vpack.c.bf16 %v205, %v201
    %v305 = vpack.c.bf16 %v285, %v282
    %v324 = vunpack.c.l.b16 %v288
    %v325 = vunpack.c.l.b16 %v289
    %v326 = vunpack.c.l.b16 %v290
    %v327 = vunpack.c.h.b16 %v288
    %v328 = vunpack.c.h.b16 %v289
    %v329 = vunpack.c.h.b16 %v290
    %v330 = vunpack.c.l.b16 %v291
    %v331 = vunpack.c.l.b16 %v292
    %v332 = vunpack.c.l.b16 %v293
    %v333 = vunpack.c.h.b16 %v291
    %v334 = vunpack.c.h.b16 %v292
    %v335 = vunpack.c.h.b16 %v293
    %v336 = vunpack.c.l.b16 %v294
    %v337 = vunpack.c.l.b16 %v295
    %v338 = vunpack.c.l.b16 %v296
    %v339 = vunpack.c.h.b16 %v294
    %v340 = vunpack.c.h.b16 %v295
    %v341 = vunpack.c.h.b16 %v296
    %v342 = vunpack.c.l.b16 %v297
    %v343 = vunpack.c.l.b16 %v298
    %v344 = vunpack.c.l.b16 %v299
    %v345 = vunpack.c.h.b16 %v297
    %v346 = vunpack.c.h.b16 %v298
    %v347 = vunpack.c.h.b16 %v299
    %v348 = vunpack.c.l.b16 %v300
    %v349 = vunpack.c.l.b16 %v301
    %v350 = vunpack.c.l.b16 %v302
    %v351 = vunpack.c.h.b16 %v300
    %v352 = vunpack.c.h.b16 %v301
    %v353 = vunpack.c.h.b16 %v302
    %v354 = vunpack.c.l.b16 %v303
    %v355 = vunpack.c.l.b16 %v304
    %v356 = vunpack.c.l.b16 %v305
    %v357 = vunpack.c.h.b16 %v303
    %v358 = vunpack.c.h.b16 %v304
    %v359 = vunpack.c.h.b16 %v305
    %v360 = vpack.c.b16 %v325, %v324
    %v361 = vpack.c.b16 %v326, %v326
    %v362 = vpack.c.b16 %v328, %v327
    %v363 = vpack.c.b16 %v329, %v329
    %v364 = vpack.c.b16 %v331, %v330
    %v365 = vpack.c.b16 %v332, %v332
    %v366 = vpack.c.b16 %v334, %v333
    %v367 = vpack.c.b16 %v335, %v335
    %v368 = vpack.c.b16 %v337, %v336
    %v369 = vpack.c.b16 %v338, %v338
    %v370 = vpack.c.b16 %v340, %v339
    %v371 = vpack.c.b16 %v341, %v341
    %v372 = vpack.c.b16 %v343, %v342
    %v373 = vpack.c.b16 %v344, %v344
    %v374 = vpack.c.b16 %v346, %v345
    %v375 = vpack.c.b16 %v347, %v347
    %v376 = vpack.c.b16 %v349, %v348
    %v377 = vpack.c.b16 %v350, %v350
    %v378 = vpack.c.b16 %v352, %v351
    %v379 = vpack.c.b16 %v353, %v353
    %v380 = vpack.c.b16 %v355, %v354
    %v381 = vpack.c.b16 %v356, %v356
    %v382 = vpack.c.b16 %v358, %v357
    %v383 = vpack.c.b16 %v359, %v359
    %408 = vst [vmem:[#allocation2] sm:$0xff] %v360
    %vm409 = vcmask 347136
    %410 = vst.msk [vmem:[#allocation2 + $0x8] sm:$0xf] %vm409, %v361
    %411 = vst [vmem:[#allocation2 + $0xc] sm:$0xff] %v362
    %412 = vst.msk [vmem:[#allocation2 + $0x14] sm:$0xf] %vm409, %v363
    %413 = vst [vmem:[#allocation2 + $0x18] sm:$0xff] %v364
    %414 = vst.msk [vmem:[#allocation2 + $0x20] sm:$0xf] %vm409, %v365
    %415 = vst [vmem:[#allocation2 + $0x24] sm:$0xff] %v366
    %416 = vst.msk [vmem:[#allocation2 + $0x2c] sm:$0xf] %vm409, %v367
    %417 = vst [vmem:[#allocation2 + $0x30] sm:$0xff] %v368
    %418 = vst.msk [vmem:[#allocation2 + $0x38] sm:$0xf] %vm409, %v369
    %419 = vst [vmem:[#allocation2 + $0x3c] sm:$0xff] %v370
    %420 = vst.msk [vmem:[#allocation2 + $0x44] sm:$0xf] %vm409, %v371
    %421 = vst [vmem:[#allocation2 + $0x48] sm:$0xff] %v372
    %422 = vst.msk [vmem:[#allocation2 + $0x50] sm:$0xf] %vm409, %v373
    %423 = vst [vmem:[#allocation2 + $0x54] sm:$0xff] %v374
    %424 = vst.msk [vmem:[#allocation2 + $0x5c] sm:$0xf] %vm409, %v375
    %425 = vst [vmem:[#allocation2 + $0x60] sm:$0xff] %v376
    %426 = vst.msk [vmem:[#allocation2 + $0x68] sm:$0xf] %vm409, %v377
    %427 = vst [vmem:[#allocation2 + $0x6c] sm:$0xff] %v378
    %428 = vst.msk [vmem:[#allocation2 + $0x74] sm:$0xf] %vm409, %v379
    %429 = vst [vmem:[#allocation2 + $0x78] sm:$0xff] %v380
    %430 = vst.msk [vmem:[#allocation2 + $0x80] sm:$0xf] %vm409, %v381
    %431 = vst [vmem:[#allocation2 + $0x84] sm:$0xff] %v382
    %432 = vst.msk [vmem:[#allocation2 + $0x8c] sm:$0xf] %vm409, %v383
    // Predicated region
    $region14: #{tpu_custom_call.1} parent=1 // pred_check
      _
    $region15: #{tpu_custom_call.1} parent=1 // pred_check_branch
      %434 = sbr.rel (0) target = $region17
    $region16: #{tpu_custom_call.1} parent=1 // pred_region
      %s436 = ssub.s32 2304, 2304
      %437 = vsyncadd [#allocation3], %s436
      %s438 = sshll.u32 [#allocation2], 4
      %s439 = int_to_ptr.vmem [resolvable:$true] %s438
      %444 = dma.vmem_to_hbm [thread:$0]  %s439, 2304, %s3, [#allocation3], 192, 192, 12
    $region17: #{tpu_custom_call.1} parent=1 // pred_fallthru
      _
    // Predicated region
    $region18: #{tpu_custom_call.1} parent=1 // pred_check
      _
    $region19: #{tpu_custom_call.1} parent=1 // pred_check_branch
      %446 = sbr.rel (0) target = $region21
    $region20: #{tpu_custom_call.1} parent=1 // pred_region
      %447 = dma.done [#allocation3], 2304
    $region21: #{tpu_custom_call.1} parent=1 // pred_fallthru
      _
    %448 = vsyncpa [#allocation3], 1

</llo_original>
